<compile_context>
chip_gen: v5e
topology: v5e:2x2
jax: 0.10.0
libtpu: 0.0.40
codegen_flags: <defaults>
</compile_context>

<pallas_src>
import functools

import jax
import jax.numpy as jnp
from jax import lax
from jax.experimental import pallas as pl
from jax.experimental.pallas import tpu as pltpu

_EPS = 1e-12   # F.normalize default eps
_LANE = 128


def _attn_loss_kernel(fa_ref, fb_ref, out_ref, amap_ref, bmap_ref, *,
                      hw_total, thw):
    hw = pl.program_id(1)
    n_hw = pl.num_programs(1)

    fa = fa_ref[...]            # (C, thw), input dtype
    fb = fb_ref[...]

    # Channel-summed squared activations for this spatial chunk.  The 1/C of
    # the PyTorch mean cancels exactly under the L2 normalization below, so
    # use sum; accumulate the reduction in f32.
    a_map = jnp.sum((fa * fa).astype(jnp.float32), axis=0, keepdims=True)   # (1, thw)
    b_map = jnp.sum((fb * fb).astype(jnp.float32), axis=0, keepdims=True)

    if hw_total % thw != 0:
        # Last chunk is partial: Pallas pads edge blocks with unspecified
        # data (no runtime bounds check on VMEM reads), so zero the
        # out-of-range lanes explicitly before they touch any sum.
        lane = lax.broadcasted_iota(jnp.int32, (1, thw), 1)
        valid = lane < (hw_total - hw * thw)
        a_map = jnp.where(valid, a_map, 0.0)
        b_map = jnp.where(valid, b_map, 0.0)

    # Persist this chunk's slice of the per-sample attention maps.
    amap_ref[pl.ds(hw, 1), :] = a_map
    bmap_ref[pl.ds(hw, 1), :] = b_map

    @pl.when(hw == n_hw - 1)
    def _():
        a = amap_ref[...]       # (n_hw, thw): full per-sample attention map
        b = bmap_ref[...]
        na = jnp.maximum(jnp.sqrt(jnp.sum(a * a)), _EPS)
        nb = jnp.maximum(jnp.sqrt(jnp.sum(b * b)), _EPS)
        d = a * (1.0 / na) - b * (1.0 / nb)
        loss_b = jnp.sum(d * d)            # == sum((a/||a|| - b/||b||)**2)
        out_ref[...] = jnp.full(out_ref.shape, loss_b, dtype=jnp.float32)


def _pick_thw(hw_total, c, itemsize, block_bytes):
    """Spatial chunk (lane) length per (C, thw) block.

    If the whole spatial extent fits the per-block byte budget, use it
    directly (single chunk, exact lane count — block dim equals the full
    array dim, so the (8,128) rule is satisfied and no masking is needed).
    Otherwise use the largest multiple of 128 lanes under the budget; the
    last chunk may be partial and is masked in-kernel.
    """
    cap_lanes = max(1, block_bytes // (c * itemsize * _LANE))
    if hw_total <= cap_lanes * _LANE:
        return hw_total
    return cap_lanes * _LANE


def attn_loss(f_a, f_b, *, block_bytes=4 * 1024 * 1024):
    """f_a, f_b: (B, C, H, W) arrays. Returns scalar loss (float32).

    block_bytes bounds one (C, thw) input block.  The 4 MiB default gives
    2 inputs x 2 pipeline buffers = 16 MiB of block traffic, comfortably
    inside the 32 MiB scoped-VMEM limit on every generation (v7x has only
    64 MiB physical VMEM) while staying >=85% of the HBM roofline.
    """
    assert f_a.shape == f_b.shape
    B, C, H, W = f_a.shape
    HW = H * W

    fa = f_a.reshape(B, C, HW)
    fb = f_b.reshape(B, C, HW)

    itemsize = jnp.dtype(f_a.dtype).itemsize
    thw = _pick_thw(HW, C, itemsize, block_bytes)
    n_hw = (HW + thw - 1) // thw

    kernel = functools.partial(_attn_loss_kernel, hw_total=HW, thw=thw)

    # TODO(synk): on v7x with B == 1 (or odd B) split the hw-chunk axis across
    # the two TensorCores (pl.core_map) and merge the per-core partial maps;
    # with the batch axis "parallel" one core idles in that case.
    # TODO(synk): for extremely large HW (per-sample map scratch no longer fits
    # VMEM) fall back to streaming running-sum accumulators.
    out = pl.pallas_call(
        kernel,
        out_shape=jax.ShapeDtypeStruct((B, 8, _LANE), jnp.float32),
        grid_spec=pltpu.PrefetchScalarGridSpec(
            num_scalar_prefetch=0,
            grid=(B, n_hw),
            in_specs=[
                pl.BlockSpec((pl.Squeezed(), C, thw), lambda b, hw: (b, 0, hw)),
                pl.BlockSpec((pl.Squeezed(), C, thw), lambda b, hw: (b, 0, hw)),
            ],
            out_specs=pl.BlockSpec((1, 8, _LANE), lambda b, hw: (b, 0, 0)),
            scratch_shapes=[
                pltpu.VMEM((n_hw, thw), jnp.float32),   # per-sample a-map
                pltpu.VMEM((n_hw, thw), jnp.float32),   # per-sample b-map
            ],
        ),
        compiler_params=pltpu.CompilerParams(
            dimension_semantics=("parallel", "arbitrary"),
            vmem_limit_bytes=32 * 1024 * 1024,
        ),
    )(fa, fb)

    # tiny per-sample reduction + /B in plain XLA
    return jnp.sum(out[:, 0, 0]) / B


def _attn_loss_ref(f_a, f_b):
    """Pure-JAX reference mirroring the PyTorch module."""
    B = f_a.shape[0]

    def at(f):
        m = jnp.mean(f.astype(jnp.float32) ** 2, axis=1).reshape(B, -1)
        nrm = jnp.sqrt(jnp.sum(m * m, axis=-1, keepdims=True))
        return m / jnp.maximum(nrm, _EPS)

    d = at(f_a) - at(f_b)
    return jnp.sum(d * d) / B


if __name__ == "__main__":
    key = jax.random.PRNGKey(0)

    # Case 1: lane-aligned spatial extent (single chunk, no masking).
    k1, k2 = jax.random.split(key)
    f_a = jax.random.normal(k1, (2, 4, 16, 16), dtype=jnp.float32)
    f_b = jax.random.normal(k2, (2, 4, 16, 16), dtype=jnp.float32)
    loss = attn_loss(f_a, f_b)
    jax.block_until_ready(loss)
    ref = _attn_loss_ref(f_a, f_b)
    assert jnp.allclose(loss, ref, rtol=2e-4, atol=1e-6), (loss, ref)

    # Case 2: non-lane-aligned spatial extent (HW=49, single exact chunk) —
    # previously this shape forced an HBM-materializing pad.
    k3, k4 = jax.random.split(k2)
    g_a = jax.random.normal(k3, (2, 4, 7, 7), dtype=jnp.float32)
    g_b = jax.random.normal(k4, (2, 4, 7, 7), dtype=jnp.float32)
    loss2 = attn_loss(g_a, g_b)
    jax.block_until_ready(loss2)
    ref2 = _attn_loss_ref(g_a, g_b)
    assert jnp.allclose(loss2, ref2, rtol=2e-4, atol=1e-6), (loss2, ref2)

    # Case 3: forced multi-chunk with a partial last chunk (HW=324, thw=128)
    # — exercises the chunked map scratch and the in-kernel tail masking.
    k5, k6 = jax.random.split(k4)
    h_a = jax.random.normal(k5, (2, 4, 18, 18), dtype=jnp.float32)
    h_b = jax.random.normal(k6, (2, 4, 18, 18), dtype=jnp.float32)
    loss3 = attn_loss(h_a, h_b, block_bytes=4 * 4 * 128)
    jax.block_until_ready(loss3)
    ref3 = _attn_loss_ref(h_a, h_b)
    assert jnp.allclose(loss3, ref3, rtol=2e-4, atol=1e-6), (loss3, ref3)

    print("KERNEL_OK")
</pallas_src>

<mosaic_0001>
module attributes {stable_mosaic.version = 11 : i64} {
  func.func @_attn_loss_kernel(%arg0: i32, %arg1: i32, %arg2: memref<1x4x256xf32, #tpu.memory_space<vmem>>, %arg3: memref<1x4x256xf32, #tpu.memory_space<vmem>>, %arg4: memref<1x8x128xf32, #tpu.memory_space<vmem>>, %arg5: memref<1x256xf32, #tpu.memory_space<vmem>>, %arg6: memref<1x256xf32, #tpu.memory_space<vmem>>) attributes {dimension_semantics = [#tpu.dimension_semantics<parallel>, #tpu.dimension_semantics<arbitrary>], iteration_bounds = array<i64: 2, 1>, scalar_prefetch = 0 : i64, scratch_operands = 2 : i64, tpu.core_type = #tpu.core_type<tc>, window_params = [{transform_indices = @transform_0, window_bounds = array<i64: 1, 4, 256>}, {transform_indices = @transform_1, window_bounds = array<i64: 1, 4, 256>}, {transform_indices = @transform_2, window_bounds = array<i64: 1, 8, 128>}]} {
    %c0 = arith.constant 0 : index
    %c0_0 = arith.constant 0 : index
    %c0_1 = arith.constant 0 : index
    %0 = vector.load %arg2[%c0, %c0_0, %c0_1] : memref<1x4x256xf32, #tpu.memory_space<vmem>>, vector<1x4x256xf32>
    %1 = vector.shape_cast %0 : vector<1x4x256xf32> to vector<4x256xf32>
    %c0_2 = arith.constant 0 : index
    %c0_3 = arith.constant 0 : index
    %c0_4 = arith.constant 0 : index
    %2 = vector.load %arg3[%c0_2, %c0_3, %c0_4] : memref<1x4x256xf32, #tpu.memory_space<vmem>>, vector<1x4x256xf32>
    %3 = vector.shape_cast %2 : vector<1x4x256xf32> to vector<4x256xf32>
    %4 = arith.mulf %1, %1 : vector<4x256xf32>
    %cst = arith.constant dense<0.000000e+00> : vector<256xf32>
    %5 = vector.multi_reduction <add>, %4, %cst [0] : vector<4x256xf32> to vector<256xf32>
    %6 = vector.shape_cast %5 : vector<256xf32> to vector<1x256xf32>
    %7 = arith.mulf %3, %3 : vector<4x256xf32>
    %cst_5 = arith.constant dense<0.000000e+00> : vector<256xf32>
    %8 = vector.multi_reduction <add>, %7, %cst_5 [0] : vector<4x256xf32> to vector<256xf32>
    %9 = vector.shape_cast %8 : vector<256xf32> to vector<1x256xf32>
    %10 = arith.index_cast %arg1 : i32 to index
    %c0_6 = arith.constant 0 : index
    %11 = vector.load %arg5[%10, %c0_6] : memref<1x256xf32, #tpu.memory_space<vmem>>, vector<1x256xf32>
    tpu.vector_store %arg5[%10, %c0_6], %6 {strides = array<i32>} : memref<1x256xf32, #tpu.memory_space<vmem>>, vector<1x256xf32>,
    %12 = arith.index_cast %arg1 : i32 to index
    %c0_7 = arith.constant 0 : index
    %13 = vector.load %arg6[%12, %c0_7] : memref<1x256xf32, #tpu.memory_space<vmem>>, vector<1x256xf32>
    tpu.vector_store %arg6[%12, %c0_7], %9 {strides = array<i32>} : memref<1x256xf32, #tpu.memory_space<vmem>>, vector<1x256xf32>,
    %c0_i32 = arith.constant 0 : i32
    %14 = arith.cmpi eq, %arg1, %c0_i32 : i32
    %15 = arith.extui %14 : i1 to i32
    %c0_i32_8 = arith.constant 0 : i32
    %16 = arith.cmpi ne, %15, %c0_i32_8 : i32
    scf.if %16 {
      %c0_9 = arith.constant 0 : index
      %c0_10 = arith.constant 0 : index
      %17 = vector.load %arg5[%c0_9, %c0_10] : memref<1x256xf32, #tpu.memory_space<vmem>>, vector<1x256xf32>
      %c0_11 = arith.constant 0 : index
      %c0_12 = arith.constant 0 : index
      %18 = vector.load %arg6[%c0_11, %c0_12] : memref<1x256xf32, #tpu.memory_space<vmem>>, vector<1x256xf32>
      %19 = arith.mulf %17, %17 : vector<1x256xf32>
      %20 = vector.shape_cast %19 : vector<1x256xf32> to vector<1x1x256xf32>
      %cst_13 = arith.constant dense<0.000000e+00> : vector<1xf32>
      %21 = vector.multi_reduction <add>, %20, %cst_13 [1, 2] : vector<1x1x256xf32> to vector<1xf32>
      %22 = vector.shape_cast %21 : vector<1xf32> to vector<1x1x1xf32>
      %23 = vector.extract %22[0, 0, 0] : f32 from vector<1x1x1xf32>
      %24 = math.sqrt %23 : f32
      %cst_14 = arith.constant 9.99999996E-13 : f32
      %25 = arith.maximumf %24, %cst_14 : f32
      %26 = arith.mulf %18, %18 : vector<1x256xf32>
      %27 = vector.shape_cast %26 : vector<1x256xf32> to vector<1x1x256xf32>
      %cst_15 = arith.constant dense<0.000000e+00> : vector<1xf32>
      %28 = vector.multi_reduction <add>, %27, %cst_15 [1, 2] : vector<1x1x256xf32> to vector<1xf32>
      %29 = vector.shape_cast %28 : vector<1xf32> to vector<1x1x1xf32>
      %30 = vector.extract %29[0, 0, 0] : f32 from vector<1x1x1xf32>
      %31 = math.sqrt %30 : f32
      %cst_16 = arith.constant 9.99999996E-13 : f32
      %32 = arith.maximumf %31, %cst_16 : f32
      %cst_17 = arith.constant 1.000000e+00 : f32
      %33 = arith.divf %cst_17, %25 : f32
      %34 = vector.broadcast %33 : f32 to vector<1x256xf32>
      %35 = arith.mulf %17, %34 : vector<1x256xf32>
      %cst_18 = arith.constant 1.000000e+00 : f32
      %36 = arith.divf %cst_18, %32 : f32
      %37 = vector.broadcast %36 : f32 to vector<1x256xf32>
      %38 = arith.mulf %18, %37 : vector<1x256xf32>
      %39 = arith.subf %35, %38 : vector<1x256xf32>
      %40 = arith.mulf %39, %39 : vector<1x256xf32>
      %41 = vector.shape_cast %40 : vector<1x256xf32> to vector<1x1x256xf32>
      %cst_19 = arith.constant dense<0.000000e+00> : vector<1xf32>
      %42 = vector.multi_reduction <add>, %41, %cst_19 [1, 2] : vector<1x1x256xf32> to vector<1xf32>
      %43 = vector.shape_cast %42 : vector<1xf32> to vector<1x1x1xf32>
      %44 = vector.extract %43[0, 0, 0] : f32 from vector<1x1x1xf32>
      %45 = vector.broadcast %44 : f32 to vector<1x8x128xf32>
      %c0_20 = arith.constant 0 : index
      %c0_21 = arith.constant 0 : index
      %c0_22 = arith.constant 0 : index
      %46 = vector.load %arg4[%c0_20, %c0_21, %c0_22] : memref<1x8x128xf32, #tpu.memory_space<vmem>>, vector<1x8x128xf32>
      tpu.vector_store %arg4[%c0_20, %c0_21, %c0_22], %45 {strides = array<i32>} : memref<1x8x128xf32, #tpu.memory_space<vmem>>, vector<1x8x128xf32>,
    } else {
    }
    return
  }
  func.func @transform_0(%arg0: i32, %arg1: i32) -> (i32, i32, i32) {
    %c0_i32 = arith.constant 0 : i32
    %c0_i32_0 = arith.constant 0 : i32
    return %arg0, %c0_i32, %arg1 : i32, i32, i32
  }
  func.func @transform_1(%arg0: i32, %arg1: i32) -> (i32, i32, i32) {
    %c0_i32 = arith.constant 0 : i32
    %c0_i32_0 = arith.constant 0 : i32
    return %arg0, %c0_i32, %arg1 : i32, i32, i32
  }
  func.func @transform_2(%arg0: i32, %arg1: i32) -> (i32, i32, i32) {
    %c0_i32 = arith.constant 0 : i32
    %c0_i32_0 = arith.constant 0 : i32
    %c0_i32_1 = arith.constant 0 : i32
    return %arg0, %c0_i32, %c0_i32_0 : i32, i32, i32
  }
}

</mosaic_0001>

<llo_original>
// kernel: tpu_custom_call.1
$region0: #{tpu_custom_call.1}
  #allocation0 [shape = 'u32[]', space=smem, size = 0x4, offset = 0x4, fixed_abs, tag = 'smem constant byte address 0x4 - core index']
  #allocation1 [shape = 'u32[72,128]{1,0:T(1,128)}', space=vmem, size = 0x9000, scoped, tag = 'internal scratch']
  #allocation2 [shape = 'f32[1,256]{1,0:T(1,128)}', space=vmem, size = 0x400, scoped, tag = 'scratch operand']
  #allocation3 [shape = 'f32[1,256]{1,0:T(1,128)}', space=vmem, size = 0x400, scoped, tag = 'scratch operand']
  %s0 = inlined_call_operand.hbm [shape: f32[2,4,256], index: 0, kind: input, shape index: {}]
  %s1 = inlined_call_operand.hbm [shape: f32[2,4,256], index: 1, kind: input, shape index: {}]
  %s2 = inlined_call_operand.hbm [shape: f32[2,8,128], index: 2, kind: output, shape index: {}]
  %s3 = sld [smem:[#allocation0]]
  $region53: #{tpu_custom_call.1} parent=0
    _
  %s5 = ssub.s32 1, %s3
  %s6 = scalar_select 0, %s5, %s3
  $region1: #{tpu_custom_call.1} parent=0
    #allocation4 [shape = 'u8[8192]{0}', space=vmem, size = 0x2000, scoped, tag = 'input window, operand 0']
    #allocation5 [shape = 's32[2]{0}', space=sflag, size = 0x8, scoped, tag = 'scoped memory for tpu_custom_call.1']
    #allocation6 [shape = 's32[2]{0}', space=sflag, size = 0x8, scoped, tag = 'scoped memory for tpu_custom_call.1']
    #allocation7 [shape = 'u8[8192]{0}', space=vmem, size = 0x2000, scoped, tag = 'input window, operand 1']
    #allocation8 [shape = 's32[2]{0}', space=sflag, size = 0x8, scoped, tag = 'scoped memory for tpu_custom_call.1']
    #allocation9 [shape = 'u8[8192]{0}', space=vmem, size = 0x2000, scoped, tag = 'output window, operand 0']
    %7 = vsyncpa [#allocation5], 0
    %s8 = scalar_lea.sflag [#allocation5], 1
    %9 = vsyncpa %s8, 0
    %10 = vsyncpa [#allocation8], 0
    %s11 = scalar_lea.sflag [#allocation8], 1
    %12 = vsyncpa %s11, 0
    %13 = vsyncpa [#allocation6], 0
    %s14 = scalar_lea.sflag [#allocation6], 1
    %15 = vsyncpa %s14, 0
    loop: start=0, step=1, limit=4
    $region2: #{tpu_custom_call.1} parent=1 // loop_pre_header
      _
    $region3: #{tpu_custom_call.1} parent=1 // loop_header
      %s17 = sphi 0, %s21
      %p18 = scmp.ge.s32.totalorder %s17, 4
      %s24 = sphi 0, %s36
      %s25 = sphi 0, %s32
      %s26 = sphi 0, %s24
      %s27 = sphi 0, %s25
      %s28 = sphi 0, %s26
      %s29 = sphi 0, %s27
      %s41 = sphi 0, %s43
      %s44 = sphi 0, %s41
      %s45 = sphi 0, %s44
      %s61 = sphi 0, %s45
      %s69 = sphi 0, %s71
      %s72 = sphi 0, %s69
      %s73 = sphi 0, %s72
      %s89 = sphi 0, %s73
      %s95 = sphi 0, %s97
      %s98 = sphi 0, %s95
      %s99 = sphi 0, %s98
      %s115 = sphi 0, %s99
    $region4: #{tpu_custom_call.1} parent=1 // loop_header_branch
      %20 = sbr.rel (%p18) target = $region8
    $region5: #{tpu_custom_call.1} parent=1 // loop_body
      %s22 = ssub.s32 %s17, 1
      %s23 = ssub.s32 %s17, 2
      %s30 = sadd.s32 1, %s25
      %p31 = scmp.ge.s32.totalorder %s30, 1
      %s32 = scalar_select %p31, 0, %s30
      %s33 = sadd.s32 1, %s24
      %s34 = scalar_select %p31, %s33, %s24
      %p35 = scmp.ge.s32.totalorder %s34, 2
      %s36 = scalar_select %p35, 0, %s34
      %s37 = ssub.s32 %s24, %s36
      %s38 = ssub.s32 %s25, %s32
      %s39 = sor.u32 %s37, %s38
      %p40 = scmp.eq.s32.totalorder %s39, 0
      %s42 = sadd.s32 %s41, 1
      %s43 = scalar_select %p40, %s41, %s42
      %p46 = pneg %p40
      %p47 = scmp.eq.s32.totalorder %s17, 1
      %p48 = por %p46, %p47
      %p49 = scmp.ne.s32.totalorder %s41, %s44
      %p50 = scmp.eq.s32.totalorder %s17, 0
      %p51 = por %p49, %p50
      %p52 = scmp.ne.s32.totalorder %s41, %s44
      %p53 = scmp.eq.s32.totalorder %s22, 1
      %p54 = por %p52, %p53
      %p55 = scmp.ne.s32.totalorder %s44, %s45
      %p56 = scmp.eq.s32.totalorder %s22, 0
      %p57 = por %p55, %p56
      %p58 = scmp.ne.s32.totalorder %s44, %s45
      %p59 = scmp.eq.s32.totalorder %s23, 1
      %p60 = por %p58, %p59
      %p62 = scmp.ne.s32.totalorder %s45, %s61
      %p63 = scmp.eq.s32.totalorder %s23, 0
      %p64 = por %p62, %p63
      %s65 = ssub.s32 %s24, %s36
      %s66 = ssub.s32 %s25, %s32
      %s67 = sor.u32 %s65, %s66
      %p68 = scmp.eq.s32.totalorder %s67, 0
      %s70 = sadd.s32 %s69, 1
      %s71 = scalar_select %p68, %s69, %s70
      %p74 = pneg %p68
      %p75 = scmp.eq.s32.totalorder %s17, 1
      %p76 = por %p74, %p75
      %p77 = scmp.ne.s32.totalorder %s69, %s72
      %p78 = scmp.eq.s32.totalorder %s17, 0
      %p79 = por %p77, %p78
      %p80 = scmp.ne.s32.totalorder %s69, %s72
      %p81 = scmp.eq.s32.totalorder %s22, 1
      %p82 = por %p80, %p81
      %p83 = scmp.ne.s32.totalorder %s72, %s73
      %p84 = scmp.eq.s32.totalorder %s22, 0
      %p85 = por %p83, %p84
      %p86 = scmp.ne.s32.totalorder %s72, %s73
      %p87 = scmp.eq.s32.totalorder %s23, 1
      %p88 = por %p86, %p87
      %p90 = scmp.ne.s32.totalorder %s73, %s89
      %p91 = scmp.eq.s32.totalorder %s23, 0
      %p92 = por %p90, %p91
      %s93 = ssub.s32 %s24, %s36
      %p94 = scmp.eq.s32.totalorder %s93, 0
      %s96 = sadd.s32 %s95, 1
      %s97 = scalar_select %p94, %s95, %s96
      %p100 = pneg %p94
      %p101 = scmp.eq.s32.totalorder %s17, 1
      %p102 = por %p100, %p101
      %p103 = scmp.ne.s32.totalorder %s95, %s98
      %p104 = scmp.eq.s32.totalorder %s17, 0
      %p105 = por %p103, %p104
      %p106 = scmp.ne.s32.totalorder %s95, %s98
      %p107 = scmp.eq.s32.totalorder %s22, 1
      %p108 = por %p106, %p107
      %p109 = scmp.ne.s32.totalorder %s98, %s99
      %p110 = scmp.eq.s32.totalorder %s22, 0
      %p111 = por %p109, %p110
      %p112 = scmp.ne.s32.totalorder %s98, %s99
      %p113 = scmp.eq.s32.totalorder %s23, 1
      %p114 = por %p112, %p113
      %p116 = scmp.ne.s32.totalorder %s99, %s115
      %p117 = scmp.eq.s32.totalorder %s23, 0
      %p118 = por %p116, %p117
      %p119 = scmp.le.s32.totalorder 1, %s17
      %p120 = scmp.lt.s32.totalorder %s17, 3
      %p121 = pnand %p119, %p120
      %p122 = pneg %p121
      // Predicated region
      $region9: #{tpu_custom_call.1} parent=5 // pred_check
        _
      $region10: #{tpu_custom_call.1} parent=5 // pred_check_branch
        %124 = sbr.rel (%p121) target = $region12
      $region11: #{tpu_custom_call.1} parent=5 // pred_region
        %s125 = ssub.s32 %s17, 1
      $region12: #{tpu_custom_call.1} parent=5 // pred_fallthru
        _
      %p126 = scmp.lt.s32.totalorder %s17, 2
      // Predicated region
      $region13: #{tpu_custom_call.1} parent=5 // pred_check
        %p127 = pneg %p126
      $region14: #{tpu_custom_call.1} parent=5 // pred_check_branch
        %129 = sbr.rel (%p127) target = $region16
      $region15: #{tpu_custom_call.1} parent=5 // pred_region
        // Predicated region
        $region17: #{tpu_custom_call.1} parent=15 // pred_check
          %p130 = pneg %p51
        $region18: #{tpu_custom_call.1} parent=15 // pred_check_branch
          %132 = sbr.rel (%p130) target = $region20
        $region19: #{tpu_custom_call.1} parent=15 // pred_region
          %s133 = sand.u32 %s41, 1
          %s134 = scalar_lea.sflag [#allocation5], %s133
          %s135 = sand.u32 %s41, 1
          %s136 = smul.addr %s135, 8
          %s137 = scalar_lea.vmem [#allocation4], %s136
          %s138 = smul.u32 2, %s25
          %140 = vsyncadd %s134, 0
          %s141 = smul.addr %s24, 2
          %s142 = sadd.s32 %s138, %s141
          %s143 = smul.addr %s142, 4
          %s144 = scalar_lea.hbm %s0, %s143
          %s146 = sshll.u32 %s144, 4
          %s147 = int_to_ptr.hbm [resolvable:$true] %s146
          %s148 = sshll.u32 %s137, 4
          %s149 = int_to_ptr.vmem [resolvable:$true] %s148
          %151 = dma.hbm_to_vmem [thread:$0]  %s147, 128, %s149, %s134
        $region20: #{tpu_custom_call.1} parent=15 // pred_fallthru
          _
        // Predicated region
        $region21: #{tpu_custom_call.1} parent=15 // pred_check
          %p152 = pneg %p79
        $region22: #{tpu_custom_call.1} parent=15 // pred_check_branch
          %154 = sbr.rel (%p152) target = $region24
        $region23: #{tpu_custom_call.1} parent=15 // pred_region
          %s155 = sand.u32 %s69, 1
          %s156 = scalar_lea.sflag [#allocation8], %s155
          %s157 = sand.u32 %s69, 1
          %s158 = smul.addr %s157, 8
          %s159 = scalar_lea.vmem [#allocation7], %s158
          %s160 = smul.u32 2, %s25
          %162 = vsyncadd %s156, 0
          %s163 = smul.addr %s24, 2
          %s164 = sadd.s32 %s160, %s163
          %s165 = smul.addr %s164, 4
          %s166 = scalar_lea.hbm %s1, %s165
          %s168 = sshll.u32 %s166, 4
          %s169 = int_to_ptr.hbm [resolvable:$true] %s168
          %s170 = sshll.u32 %s159, 4
          %s171 = int_to_ptr.vmem [resolvable:$true] %s170
          %173 = dma.hbm_to_vmem [thread:$0]  %s169, 128, %s171, %s156
        $region24: #{tpu_custom_call.1} parent=15 // pred_fallthru
          _
      $region16: #{tpu_custom_call.1} parent=5 // pred_fallthru
        _
      %p174 = scmp.le.s32.totalorder 1, %s17
      %p175 = scmp.lt.s32.totalorder %s17, 3
      %p176 = pnand %p174, %p175
      %p177 = pneg %p176
      // Predicated region
      $region25: #{tpu_custom_call.1} parent=5 // pred_check
        _
      $region26: #{tpu_custom_call.1} parent=5 // pred_check_branch
        %179 = sbr.rel (%p176) target = $region28
      $region27: #{tpu_custom_call.1} parent=5 // pred_region
        %s180 = ssub.s32 %s17, 1
        %s181 = sand.u32 %s44, 1
        %s182 = scalar_lea.sflag [#allocation5], %s181
        %s183 = sand.u32 %s44, 1
        %s184 = smul.addr %s183, 8
        %s185 = scalar_lea.vmem [#allocation4], %s184
        // Predicated region
        $region29: #{tpu_custom_call.1} parent=27 // pred_check
          %p186 = pneg %p57
        $region30: #{tpu_custom_call.1} parent=27 // pred_check_branch
          %188 = sbr.rel (%p186) target = $region32
        $region31: #{tpu_custom_call.1} parent=27 // pred_region
          %190 = dma.done %s182, 128
        $region32: #{tpu_custom_call.1} parent=27 // pred_fallthru
          _
        %s191 = sand.u32 %s72, 1
        %s192 = scalar_lea.sflag [#allocation8], %s191
        %s193 = sand.u32 %s72, 1
        %s194 = smul.addr %s193, 8
        %s195 = scalar_lea.vmem [#allocation7], %s194
        // Predicated region
        $region33: #{tpu_custom_call.1} parent=27 // pred_check
          %p196 = pneg %p85
        $region34: #{tpu_custom_call.1} parent=27 // pred_check_branch
          %198 = sbr.rel (%p196) target = $region36
        $region35: #{tpu_custom_call.1} parent=27 // pred_region
          %200 = dma.done %s192, 128
        $region36: #{tpu_custom_call.1} parent=27 // pred_fallthru
          _
        %s201 = sand.u32 %s44, 1
        %s202 = scalar_lea.sflag [#allocation5], %s201
        %s203 = sand.u32 %s44, 1
        %s204 = smul.addr %s203, 8
        %s205 = scalar_lea.vmem [#allocation4], %s204
        %p206 = pneg %p57
        %p207 = pneg %p54
        %s208 = sand.u32 %s72, 1
        %s209 = scalar_lea.sflag [#allocation8], %s208
        %s210 = sand.u32 %s72, 1
        %s211 = smul.addr %s210, 8
        %s212 = scalar_lea.vmem [#allocation7], %s211
        %p213 = pneg %p85
        %p214 = pneg %p82
        %p215 = pneg %p111
        %p216 = pneg %p108
        %s217 = sand.u32 %s98, 1
        %s218 = scalar_lea.sflag [#allocation6], %s217
        %s219 = sand.u32 %s98, 1
        %s220 = smul.addr %s219, 8
        %s221 = scalar_lea.vmem [#allocation9], %s220
        %s222 = smul.u32 2, %s27
        %s223 = smul.u32 2, %s27
        %v224 = vld [vmem:[%s185] sm:$0xff]
        %v225 = vld [vmem:[%s195] sm:$0xff]
        %v226 = vmul.f32 %v224, %v224
        %228 = vst [vmem:[#allocation1] ss:$2 sm:$0xff] %v226
        %v229 = vld.sshfl [vmem:[#allocation1] sm:$0xff pattern:$0x75316420]
        %v230 = vld.sshfl [vmem:[#allocation1 + $0x8] sm:$0xff pattern:$0x75316420]
        %vm233 = vcmask 1043456
        %v234 = vsel %vm233, %v229, 0.0
        %v235 = vrot.slane %v234, 4
        %v236 = vadd.f32 %v234, %v235
        %v237 = vrot.slane %v236, 2
        %v238 = vadd.f32 %v236, %v237
        %v239 = vrot.slane %v238, 1
        %v240 = vadd.f32 %v238, %v239
        %v241 = vsel %vm233, %v230, 0.0
        %v242 = vrot.slane %v241, 4
        %v243 = vadd.f32 %v241, %v242
        %v244 = vrot.slane %v243, 2
        %v245 = vadd.f32 %v243, %v244
        %v246 = vrot.slane %v245, 1
        %v247 = vadd.f32 %v245, %v246
        %v248 = vmul.f32 %v225, %v225
        %250 = vst [vmem:[#allocation1] ss:$2 sm:$0xff] %v248
        %v251 = vld.sshfl [vmem:[#allocation1] sm:$0xff pattern:$0x75316420]
        %v252 = vld.sshfl [vmem:[#allocation1 + $0x8] sm:$0xff pattern:$0x75316420]
        %v255 = vsel %vm233, %v251, 0.0
        %v256 = vrot.slane %v255, 4
        %v257 = vadd.f32 %v255, %v256
        %v258 = vrot.slane %v257, 2
        %v259 = vadd.f32 %v257, %v258
        %v260 = vrot.slane %v259, 1
        %v261 = vadd.f32 %v259, %v260
        %v262 = vsel %vm233, %v252, 0.0
        %v263 = vrot.slane %v262, 4
        %v264 = vadd.f32 %v262, %v263
        %v265 = vrot.slane %v264, 2
        %v266 = vadd.f32 %v264, %v265
        %v267 = vrot.slane %v266, 1
        %v268 = vadd.f32 %v266, %v267
        %v271 = vrot.slane %v247, 7
        %vm272 = vcmask 1040384
        %v273 = vsel %vm272, %v240, %v271
        %s275 = smul.u32 %s27, 2
        %s276 = scalar_lea.vmem [#allocation2], %s275
        %v277 = vlaneseq
        %vm278 = vcmp.ge.s32.totalorder %v277, 0
        %vm279 = vcmp.lt.s32.totalorder %v277, 256
        %vm280 = vmand %vm278, %vm279
        %281 = vst.msk [vmem:[%s276] sm:$0x3] %vm280, %v273
        %v284 = vrot.slane %v268, 7
        %v285 = vsel %vm272, %v261, %v284
        %s287 = scalar_lea.vmem [#allocation3], %s275
        %288 = vst.msk [vmem:[%s287] sm:$0x3] %vm280, %v285
        %p289 = scmp.eq.s32.totalorder %s27, 0
        // Predicated region
        $region37: #{tpu_custom_call.1} parent=27 // pred_check
          %p290 = pneg %p289
        $region38: #{tpu_custom_call.1} parent=27 // pred_check_branch
          %292 = sbr.rel (%p290) target = $region40
        $region39: #{tpu_custom_call.1} parent=27 // pred_region
          %v293 = vld [vmem:[#allocation2] sm:$0x3]
          %v294 = vld [vmem:[#allocation3] sm:$0x3]
          %v295 = vmul.f32 %v293, %v293
          %v297 = vperm.slane %v295, 0
          %v298 = vperm.slane %v295, 1
          %v301 = vsel %vm272, %v297, 0.0
          %v302 = vsel %vm272, %v298, 0.0
          %v303 = vadd.f32 %v301, %v302
          %304 = vadd.xlane.f32.xlu0 %v303
          %v305 = vpop.xlane.xlu0 %304
          %v306 = vrot.slane %v305, 4
          %v307 = vadd.f32 %v305, %v306
          %v308 = vrot.slane %v307, 2
          %v309 = vadd.f32 %v307, %v308
          %v310 = vrot.slane %v309, 1
          %v311 = vadd.f32 %v309, %v310
          %s312 = vtos %v311
          %v313 = vstv %s312
          %v314 = vrsqrt.pop %v313
          %v315 = vmul.f32 %v314, %v313
          %v316 = vmul.f32 %v315, %v314
          %v317 = vmul.f32 0.5, %v316
          %v318 = vsub.f32 1.5, %v317
          %v319 = vmul.f32 %v314, %v318
          %v320 = vmul.f32 %v313, %v319
          %vm321 = vcmp.eq.f32.partialorder %v313, inf
          %v322 = vsel %vm321, %v313, %v320
          %vm323 = vcmp.eq.f32.partialorder %v313, 0.0
          %v324 = vand.u32 %v313, 2147483648
          %v325 = vsel %vm323, %v324, %v322
          %s326 = vtos %v325
          %s327 = smax.f32 %s326, 1e-12
          %v328 = vmul.f32 %v294, %v294
          %v330 = vperm.slane %v328, 0
          %v331 = vperm.slane %v328, 1
          %v334 = vsel %vm272, %v330, 0.0
          %v335 = vsel %vm272, %v331, 0.0
          %v336 = vadd.f32 %v334, %v335
          %337 = vadd.xlane.f32.xlu0 %v336
          %v338 = vpop.xlane.xlu0 %337
          %v339 = vrot.slane %v338, 4
          %v340 = vadd.f32 %v338, %v339
          %v341 = vrot.slane %v340, 2
          %v342 = vadd.f32 %v340, %v341
          %v343 = vrot.slane %v342, 1
          %v344 = vadd.f32 %v342, %v343
          %s345 = vtos %v344
          %v346 = vstv %s345
          %v347 = vrsqrt.pop %v346
          %v348 = vmul.f32 %v347, %v346
          %v349 = vmul.f32 %v348, %v347
          %v350 = vmul.f32 0.5, %v349
          %v351 = vsub.f32 1.5, %v350
          %v352 = vmul.f32 %v347, %v351
          %v353 = vmul.f32 %v346, %v352
          %vm354 = vcmp.eq.f32.partialorder %v346, inf
          %v355 = vsel %vm354, %v346, %v353
          %vm356 = vcmp.eq.f32.partialorder %v346, 0.0
          %v357 = vand.u32 %v346, 2147483648
          %v358 = vsel %vm356, %v357, %v355
          %s359 = vtos %v358
          %s360 = smax.f32 %s359, 1e-12
          %v361 = vstv %s327
          %v362 = vrcp.pop %v361
          %v363 = vmul.f32 %v361, %v362
          %v364 = vsub.f32 1.0, %v363
          %v365 = vmul.f32 %v362, %v364
          %v366 = vadd.f32 %v362, %v365
          %vm367 = vweird.f32 %v361
          %vm368 = vweird.f32 %v362
          %vm369 = vmor %vm367, %vm368
          %v370 = vsel %vm369, %v362, %v366
          %v371 = vand.u32 2147483647, %v361
          %vm372 = vcmp.eq.f32.partialorder %v371, 8.507059e+37
          %v373 = vand.u32 %v361, 2147483648
          %v374 = vor.u32 1.1754944e-38, %v373
          %v375 = vsel %vm372, %v374, %v370
          %s376 = vtos %v375
          %v377 = vstv %s376
          %v378 = vmul.f32 %v293, %v377
          %v379 = vstv %s360
          %v380 = vrcp.pop %v379
          %v381 = vmul.f32 %v379, %v380
          %v382 = vsub.f32 1.0, %v381
          %v383 = vmul.f32 %v380, %v382
          %v384 = vadd.f32 %v380, %v383
          %vm385 = vweird.f32 %v379
          %vm386 = vweird.f32 %v380
          %vm387 = vmor %vm385, %vm386
          %v388 = vsel %vm387, %v380, %v384
          %v389 = vand.u32 2147483647, %v379
          %vm390 = vcmp.eq.f32.partialorder %v389, 8.507059e+37
          %v391 = vand.u32 %v379, 2147483648
          %v392 = vor.u32 1.1754944e-38, %v391
          %v393 = vsel %vm390, %v392, %v388
          %s394 = vtos %v393
          %v395 = vstv %s394
          %v396 = vmul.f32 %v294, %v395
          %v397 = vsub.f32 %v378, %v396
          %v398 = vmul.f32 %v397, %v397
          %v400 = vperm.slane %v398, 0
          %v401 = vperm.slane %v398, 1
          %v404 = vsel %vm272, %v400, 0.0
          %v405 = vsel %vm272, %v401, 0.0
          %v406 = vadd.f32 %v404, %v405
          %407 = vadd.xlane.f32.xlu0 %v406
          %v408 = vpop.xlane.xlu0 %407
          %v409 = vrot.slane %v408, 4
          %v410 = vadd.f32 %v408, %v409
          %v411 = vrot.slane %v410, 2
          %v412 = vadd.f32 %v410, %v411
          %v413 = vrot.slane %v412, 1
          %v414 = vadd.f32 %v412, %v413
          %s415 = vtos %v414
          %v416 = vstv %s415
          %417 = vst [vmem:[%s221] sm:$0xff] %v416
        $region40: #{tpu_custom_call.1} parent=27 // pred_fallthru
          _
        %s418 = sand.u32 %s98, 1
        %s419 = scalar_lea.sflag [#allocation6], %s418
        %s420 = sand.u32 %s98, 1
        %s421 = smul.addr %s420, 8
        %s422 = scalar_lea.vmem [#allocation9], %s421
        // Predicated region
        $region41: #{tpu_custom_call.1} parent=27 // pred_check
          %p423 = pneg %p108
        $region42: #{tpu_custom_call.1} parent=27 // pred_check_branch
          %425 = sbr.rel (%p423) target = $region44
        $region43: #{tpu_custom_call.1} parent=27 // pred_region
          %427 = vsyncadd %s419, 0
          %s428 = smul.addr %s26, 8
          %s429 = scalar_lea.hbm %s2, %s428
          %s431 = sshll.u32 %s422, 4
          %s432 = int_to_ptr.vmem [resolvable:$true] %s431
          %s433 = sshll.u32 %s429, 4
          %s434 = int_to_ptr.hbm [resolvable:$true] %s433
          %436 = dma.vmem_to_hbm [thread:$0]  %s432, 128, %s434, %s419
        $region44: #{tpu_custom_call.1} parent=27 // pred_fallthru
          _
      $region28: #{tpu_custom_call.1} parent=5 // pred_fallthru
        _
      %p437 = scmp.le.s32.totalorder 2, %s17
      // Predicated region
      $region45: #{tpu_custom_call.1} parent=5 // pred_check
        %p438 = pneg %p437
      $region46: #{tpu_custom_call.1} parent=5 // pred_check_branch
        %440 = sbr.rel (%p438) target = $region48
      $region47: #{tpu_custom_call.1} parent=5 // pred_region
        %s441 = ssub.s32 %s17, 2
        // Predicated region
        $region49: #{tpu_custom_call.1} parent=47 // pred_check
          %p442 = pneg %p114
        $region50: #{tpu_custom_call.1} parent=47 // pred_check_branch
          %444 = sbr.rel (%p442) target = $region52
        $region51: #{tpu_custom_call.1} parent=47 // pred_region
          %s445 = sand.u32 %s99, 1
          %s446 = scalar_lea.sflag [#allocation6], %s445
          %s447 = sand.u32 %s99, 1
          %s448 = smul.addr %s447, 8
          %s449 = scalar_lea.vmem [#allocation9], %s448
          %451 = dma.done %s446, 128
        $region52: #{tpu_custom_call.1} parent=47 // pred_fallthru
          _
      $region48: #{tpu_custom_call.1} parent=5 // pred_fallthru
        _
    $region6: #{tpu_custom_call.1} parent=1 // loop_footer
      %s21 = sadd.s32 1, %s17
    $region7: #{tpu_custom_call.1} parent=1 // loop_footer_branch
      %16 = sbr.rel target = $region3
    $region8: #{tpu_custom_call.1} parent=1 // loop_exit
      _
    %452 = vsyncpa [#allocation5], 1
    %s453 = scalar_lea.sflag [#allocation5], 1
    %454 = vsyncpa %s453, 1
    %455 = vsyncpa [#allocation8], 1
    %s456 = scalar_lea.sflag [#allocation8], 1
    %457 = vsyncpa %s456, 1
    %458 = vsyncpa [#allocation6], 1
    %s459 = scalar_lea.sflag [#allocation6], 1
    %460 = vsyncpa %s459, 1

</llo_original>
